<compile_context>
chip_gen: v6e
topology: v6e:2x2x1
jax: 0.10.0
libtpu: 0.0.40
codegen_flags: <defaults>
</compile_context>

<pallas_src>
import functools
import math

import jax
import jax.numpy as jnp
from jax.experimental import pallas as pl
from jax.experimental.pallas import tpu as pltpu


def _unimodal_kernel(x_ref, w_ref, b_ref, logits_ref, param_ref, tau_ref, *,
                     log_binom, num_logits: int, eps: float):
    x = x_ref[...]                                             # (TN, F), native dtype
    w = w_ref[...]                                             # (2, F), same dtype as x
    b = b_ref[...]                                             # (2, 1), f32

    # Fused projections with batch on lanes: z = W @ x^T -> (2, TN), f32 accumulate.
    z = jax.lax.dot_general(
        w, x,
        dimension_numbers=(((1,), (1,)), ((), ())),
        preferred_element_type=jnp.float32,
    ) + b                                                      # (2, TN)

    zp = z[0:1, :]                                             # (1, TN)
    zt = z[1:2, :]                                             # (1, TN)

    # sigmoid via tanh (single EUP op, no divide): sigmoid(z) = 0.5*(tanh(z/2)+1)
    param = 0.5 * (jnp.tanh(0.5 * zp) + 1.0)                   # (1, TN), in [0, 1]

    # one-sided softplus: max(z, 0) + log1p(exp(-|z|))  (one exp + one log1p)
    softplus = jnp.maximum(zt, 0.0) + jnp.log1p(jnp.exp(-jnp.abs(zt)))
    inv_tau = 1.0 + softplus                                   # (1, TN) = 1 / tau

    # Binomial PMF log-probabilities, scaled by 1/tau.  K is static; unroll with scalar
    # immediates so no (K, 1) constants / DMAs / lane-broadcasts are needed.
    log_p = jnp.log(param + eps)                               # (1, TN)
    log_1mp = jnp.log(1.0 - param + eps)                       # (1, TN)
    k = num_logits
    rows = []
    for i in range(k):
        row = log_binom[i] + float(i) * log_p + float(k - 1 - i) * log_1mp
        rows.append(row * inv_tau)                             # (1, TN)
    logits_ref[...] = jnp.concatenate(rows, axis=0)            # (K, TN), full-lane vst
    param_ref[...] = param                                     # (1, TN)
    tau_ref[...] = pl.reciprocal(inv_tau)                      # (1, TN), exact


def _round_down_128(v: int) -> int:
    return max(128, (v // 128) * 128)


def unimodal_logits_head(x, wp, bp, wt, bt, *, num_logits: int, eps: float = 1e-6,
                         tile_n: int = 4096, transposed_outputs: bool = False):
    """Parameter fusion / tile sizing + one gridded Pallas kernel.

    The binomial-coefficient buffer of the PyTorch module is fully determined by
    `num_logits` (C(num_logits-1, i)), so it is baked in as compile-time constants.
    """
    n, f = x.shape
    k = num_logits

    # --- tile sizing (perf review) -------------------------------------------------
    # Clamp so the double-buffered, lane-padded x tile stays <= ~8 MiB (safe under
    # v5e's 16 MiB default scoped VMEM without touching vmem_limit_bytes).
    padded_f = -(-f // 128) * 128
    vmem_cap_tile = (8 * 1024 * 1024) // (2 * padded_f * x.dtype.itemsize)
    tile_n = min(tile_n, _round_down_128(vmem_cap_tile))
    if n >= 256:
        # >= 2 grid steps so both v7x TensorCores get work; keep lane alignment.
        tile_n = min(tile_n, _round_down_128(-(-n // 2)))
    elif n >= 128:
        tile_n = min(tile_n, _round_down_128(n))
    else:
        tile_n = n                                   # single tiny block (full dims)
    grid = (pl.cdiv(n, tile_n),)

    # --- parameter fusion ------------------------------------------------------------
    # Two Linear(F -> 1) heads -> one (2, F) weight (in x's dtype, MXU-native for bf16)
    # and a (2, 1) f32 bias added post-accumulation.
    w_fused = jnp.stack([wp.reshape(f), wt.reshape(f)], axis=0).astype(x.dtype)  # (2, F)
    b_fused = jnp.concatenate([bp.reshape(1), bt.reshape(1)], axis=0)
    b_fused = b_fused.astype(jnp.float32).reshape(2, 1)                          # (2, 1)

    # Compile-time binomial constants: log C(K-1, i).
    log_binom = tuple(math.log(float(math.comb(k - 1, i))) for i in range(k))

    kernel = functools.partial(_unimodal_kernel, log_binom=log_binom,
                               num_logits=k, eps=eps)

    out_shapes = (
        jax.ShapeDtypeStruct((k, n), jnp.float32),   # logits^T (lane-dense)
        jax.ShapeDtypeStruct((1, n), jnp.float32),   # param^T
        jax.ShapeDtypeStruct((1, n), jnp.float32),   # tau^T
    )

    cost = pl.CostEstimate(
        flops=4 * n * f + 10 * n * k,
        transcendentals=5 * n,
        bytes_accessed=n * f * x.dtype.itemsize + n * (k + 2) * 4 + 2 * f * x.dtype.itemsize,
    )

    logits_t, param_t, tau_t = pl.pallas_call(
        kernel,
        grid=grid,
        out_shape=out_shapes,
        in_specs=[
            pl.BlockSpec((tile_n, f), lambda i: (i, 0)),   # x, tiled along batch
            pl.BlockSpec((2, f), lambda i: (0, 0)),        # fused weights (resident)
            pl.BlockSpec((2, 1), lambda i: (0, 0)),        # fused biases (resident)
        ],
        out_specs=(
            pl.BlockSpec((k, tile_n), lambda i: (0, i)),   # lane-dense logits^T
            pl.BlockSpec((1, tile_n), lambda i: (0, i)),
            pl.BlockSpec((1, tile_n), lambda i: (0, i)),
        ),
        compiler_params=pltpu.CompilerParams(
            dimension_semantics=("parallel",),
        ),
        cost_estimate=cost,
    )(x, w_fused, b_fused)

    if transposed_outputs:
        # Lane-dense layout for consumers that can take (K, N)/(1, N): saves one full
        # extra HBM read+write of the logits.
        return logits_t, param_t, tau_t
    # Module contract: (N, K), (N, 1), (N, 1).
    return logits_t.T, param_t.T, tau_t.T


def _reference(x, wp, bp, wt, bt, num_logits, eps=1e-6):
    """Pure-JAX reference mirroring the PyTorch forward (binomial / learn_fn)."""
    binom_coef = jnp.array([math.comb(num_logits - 1, i) for i in range(num_logits)],
                           dtype=jnp.float32)
    param = jax.nn.sigmoid(x @ wp.reshape(-1, 1) + bp)                    # (N, 1)
    tau = 1.0 / (1.0 + jax.nn.softplus(x @ wt.reshape(-1, 1) + bt))       # (N, 1)
    idx = jnp.arange(num_logits, dtype=jnp.float32)
    log_f = (jnp.log(binom_coef)
             + idx * jnp.log(param + eps)
             + (num_logits - 1 - idx) * jnp.log(1.0 - param + eps))
    return log_f / tau, param, tau


if __name__ == "__main__":
    N, IN_FEATURES, NUM_LOGITS = 512, 32, 8
    EPS = 1e-6

    key = jax.random.PRNGKey(0)
    kx, kwp, kbp, kwt, kbt = jax.random.split(key, 5)

    x = jax.random.normal(kx, (N, IN_FEATURES), dtype=jnp.float32)

    # Deterministic parameter init (nn.Linear-style uniform bound).
    bound = 1.0 / math.sqrt(IN_FEATURES)
    wp = jax.random.uniform(kwp, (IN_FEATURES,), minval=-bound, maxval=bound, dtype=jnp.float32)
    bp = jax.random.uniform(kbp, (1,), minval=-bound, maxval=bound, dtype=jnp.float32)
    wt = jax.random.uniform(kwt, (IN_FEATURES,), minval=-bound, maxval=bound, dtype=jnp.float32)
    bt = jax.random.uniform(kbt, (1,), minval=-bound, maxval=bound, dtype=jnp.float32)

    # --- f32 run (exact check against the pure-JAX reference) ---------------------
    logits, param, tau = unimodal_logits_head(
        x, wp, bp, wt, bt, num_logits=NUM_LOGITS, eps=EPS)
    jax.block_until_ready((logits, param, tau))

    assert logits.shape == (N, NUM_LOGITS) and param.shape == (N, 1) and tau.shape == (N, 1)

    ref_logits, ref_param, ref_tau = _reference(x, wp, bp, wt, bt, NUM_LOGITS, EPS)
    assert jnp.allclose(param, ref_param, atol=1e-5, rtol=1e-5)
    assert jnp.allclose(tau, ref_tau, atol=1e-5, rtol=1e-5)
    assert jnp.allclose(logits, ref_logits, atol=1e-3, rtol=1e-4)

    # --- bf16 x run (halves the dominant x HBM read; MXU-native) ------------------
    x_bf16 = x.astype(jnp.bfloat16)
    logits_b, param_b, tau_b = unimodal_logits_head(
        x_bf16, wp, bp, wt, bt, num_logits=NUM_LOGITS, eps=EPS)
    jax.block_until_ready((logits_b, param_b, tau_b))
    ref_logits_b, ref_param_b, ref_tau_b = _reference(
        x_bf16.astype(jnp.float32), wp, bp, wt, bt, NUM_LOGITS, EPS)
    assert jnp.all(jnp.isfinite(logits_b))
    assert jnp.allclose(param_b, ref_param_b, atol=1e-2, rtol=1e-2)
    assert jnp.allclose(tau_b, ref_tau_b, atol=1e-2, rtol=1e-2)
    assert jnp.allclose(logits_b, ref_logits_b, atol=1.0, rtol=0.1)

    print("KERNEL_OK")
</pallas_src>

<mosaic_0001>
module attributes {stable_mosaic.version = 11 : i64} {
  func.func @_unimodal_kernel(%arg0: i32, %arg1: memref<256x32xf32, #tpu.memory_space<vmem>>, %arg2: memref<2x32xf32, #tpu.memory_space<vmem>>, %arg3: memref<2x1xf32, #tpu.memory_space<vmem>>, %arg4: memref<8x256xf32, #tpu.memory_space<vmem>>, %arg5: memref<1x256xf32, #tpu.memory_space<vmem>>, %arg6: memref<1x256xf32, #tpu.memory_space<vmem>>) attributes {dimension_semantics = [#tpu.dimension_semantics<parallel>], iteration_bounds = array<i64: 2>, scalar_prefetch = 0 : i64, scratch_operands = 0 : i64, tpu.core_type = #tpu.core_type<tc>, window_params = [{transform_indices = @transform_0, window_bounds = array<i64: 256, 32>}, {pipeline_mode = #tpu.pipeline_mode<synchronous>, transform_indices = @transform_1, window_bounds = array<i64: 2, 32>}, {pipeline_mode = #tpu.pipeline_mode<synchronous>, transform_indices = @transform_2, window_bounds = array<i64: 2, 1>}, {transform_indices = @transform_3, window_bounds = array<i64: 8, 256>}, {transform_indices = @transform_4, window_bounds = array<i64: 1, 256>}, {transform_indices = @transform_5, window_bounds = array<i64: 1, 256>}]} {
    %c0 = arith.constant 0 : index
    %c0_0 = arith.constant 0 : index
    %0 = vector.load %arg1[%c0, %c0_0] : memref<256x32xf32, #tpu.memory_space<vmem>>, vector<256x32xf32>
    %c0_1 = arith.constant 0 : index
    %c0_2 = arith.constant 0 : index
    %1 = vector.load %arg2[%c0_1, %c0_2] : memref<2x32xf32, #tpu.memory_space<vmem>>, vector<2x32xf32>
    %c0_3 = arith.constant 0 : index
    %c0_4 = arith.constant 0 : index
    %2 = vector.load %arg3[%c0_3, %c0_4] : memref<2x1xf32, #tpu.memory_space<vmem>>, vector<2x1xf32>
    %cst = arith.constant dense<0.000000e+00> : vector<2x256xf32>
    %3 = tpu.matmul %1, %0, %cst {dimension_numbers = #tpu.dot_dimension_numbers<[1], [1], [0], [0], [0, 0, 1, 0], [], []>} : vector<2x32xf32>, vector<256x32xf32>, vector<2x256xf32> -> vector<2x256xf32>
    %4 = vector.broadcast %2 : vector<2x1xf32> to vector<2x256xf32>
    %5 = arith.addf %3, %4 : vector<2x256xf32>
    %6 = vector.extract_strided_slice %5 {offsets = [0, 0], sizes = [1, 256], strides = [1, 1]} : vector<2x256xf32> to vector<1x256xf32>
    %7 = vector.extract_strided_slice %5 {offsets = [1, 0], sizes = [1, 256], strides = [1, 1]} : vector<2x256xf32> to vector<1x256xf32>
    %cst_5 = arith.constant 5.000000e-01 : f32
    %8 = vector.broadcast %cst_5 : f32 to vector<1x256xf32>
    %9 = arith.mulf %8, %6 : vector<1x256xf32>
    %10 = math.tanh %9 : vector<1x256xf32>
    %cst_6 = arith.constant 1.000000e+00 : f32
    %11 = vector.broadcast %cst_6 : f32 to vector<1x256xf32>
    %12 = arith.addf %10, %11 : vector<1x256xf32>
    %cst_7 = arith.constant 5.000000e-01 : f32
    %13 = vector.broadcast %cst_7 : f32 to vector<1x256xf32>
    %14 = arith.mulf %13, %12 : vector<1x256xf32>
    %cst_8 = arith.constant 0.000000e+00 : f32
    %15 = vector.broadcast %cst_8 : f32 to vector<1x256xf32>
    %16 = arith.maximumf %7, %15 : vector<1x256xf32>
    %17 = math.absf %7 : vector<1x256xf32>
    %cst_9 = arith.constant 0.000000e+00 : f32
    %18 = vector.broadcast %cst_9 : f32 to vector<1x256xf32>
    %19 = arith.subf %18, %17 : vector<1x256xf32>
    %20 = math.exp %19 : vector<1x256xf32>
    %21 = math.log1p %20 : vector<1x256xf32>
    %22 = arith.addf %16, %21 : vector<1x256xf32>
    %cst_10 = arith.constant 1.000000e+00 : f32
    %23 = vector.broadcast %cst_10 : f32 to vector<1x256xf32>
    %24 = arith.addf %23, %22 : vector<1x256xf32>
    %cst_11 = arith.constant 9.99999997E-7 : f32
    %25 = vector.broadcast %cst_11 : f32 to vector<1x256xf32>
    %26 = arith.addf %14, %25 : vector<1x256xf32>
    %27 = math.log %26 : vector<1x256xf32>
    %cst_12 = arith.constant 1.000000e+00 : f32
    %28 = vector.broadcast %cst_12 : f32 to vector<1x256xf32>
    %29 = arith.subf %28, %14 : vector<1x256xf32>
    %cst_13 = arith.constant 9.99999997E-7 : f32
    %30 = vector.broadcast %cst_13 : f32 to vector<1x256xf32>
    %31 = arith.addf %29, %30 : vector<1x256xf32>
    %32 = math.log %31 : vector<1x256xf32>
    %cst_14 = arith.constant 0.000000e+00 : f32
    %33 = vector.broadcast %cst_14 : f32 to vector<1x256xf32>
    %34 = arith.mulf %33, %27 : vector<1x256xf32>
    %cst_15 = arith.constant 0.000000e+00 : f32
    %35 = vector.broadcast %cst_15 : f32 to vector<1x256xf32>
    %36 = arith.addf %35, %34 : vector<1x256xf32>
    %cst_16 = arith.constant 7.000000e+00 : f32
    %37 = vector.broadcast %cst_16 : f32 to vector<1x256xf32>
    %38 = arith.mulf %37, %32 : vector<1x256xf32>
    %39 = arith.addf %36, %38 : vector<1x256xf32>
    %40 = arith.mulf %39, %24 : vector<1x256xf32>
    %cst_17 = arith.constant 1.000000e+00 : f32
    %41 = vector.broadcast %cst_17 : f32 to vector<1x256xf32>
    %42 = arith.mulf %41, %27 : vector<1x256xf32>
    %cst_18 = arith.constant 1.9459101 : f32
    %43 = vector.broadcast %cst_18 : f32 to vector<1x256xf32>
    %44 = arith.addf %43, %42 : vector<1x256xf32>
    %cst_19 = arith.constant 6.000000e+00 : f32
    %45 = vector.broadcast %cst_19 : f32 to vector<1x256xf32>
    %46 = arith.mulf %45, %32 : vector<1x256xf32>
    %47 = arith.addf %44, %46 : vector<1x256xf32>
    %48 = arith.mulf %47, %24 : vector<1x256xf32>
    %cst_20 = arith.constant 2.000000e+00 : f32
    %49 = vector.broadcast %cst_20 : f32 to vector<1x256xf32>
    %50 = arith.mulf %49, %27 : vector<1x256xf32>
    %cst_21 = arith.constant 3.04452252 : f32
    %51 = vector.broadcast %cst_21 : f32 to vector<1x256xf32>
    %52 = arith.addf %51, %50 : vector<1x256xf32>
    %cst_22 = arith.constant 5.000000e+00 : f32
    %53 = vector.broadcast %cst_22 : f32 to vector<1x256xf32>
    %54 = arith.mulf %53, %32 : vector<1x256xf32>
    %55 = arith.addf %52, %54 : vector<1x256xf32>
    %56 = arith.mulf %55, %24 : vector<1x256xf32>
    %cst_23 = arith.constant 3.000000e+00 : f32
    %57 = vector.broadcast %cst_23 : f32 to vector<1x256xf32>
    %58 = arith.mulf %57, %27 : vector<1x256xf32>
    %cst_24 = arith.constant 3.55534816 : f32
    %59 = vector.broadcast %cst_24 : f32 to vector<1x256xf32>
    %60 = arith.addf %59, %58 : vector<1x256xf32>
    %cst_25 = arith.constant 4.000000e+00 : f32
    %61 = vector.broadcast %cst_25 : f32 to vector<1x256xf32>
    %62 = arith.mulf %61, %32 : vector<1x256xf32>
    %63 = arith.addf %60, %62 : vector<1x256xf32>
    %64 = arith.mulf %63, %24 : vector<1x256xf32>
    %cst_26 = arith.constant 4.000000e+00 : f32
    %65 = vector.broadcast %cst_26 : f32 to vector<1x256xf32>
    %66 = arith.mulf %65, %27 : vector<1x256xf32>
    %cst_27 = arith.constant 3.55534816 : f32
    %67 = vector.broadcast %cst_27 : f32 to vector<1x256xf32>
    %68 = arith.addf %67, %66 : vector<1x256xf32>
    %cst_28 = arith.constant 3.000000e+00 : f32
    %69 = vector.broadcast %cst_28 : f32 to vector<1x256xf32>
    %70 = arith.mulf %69, %32 : vector<1x256xf32>
    %71 = arith.addf %68, %70 : vector<1x256xf32>
    %72 = arith.mulf %71, %24 : vector<1x256xf32>
    %cst_29 = arith.constant 5.000000e+00 : f32
    %73 = vector.broadcast %cst_29 : f32 to vector<1x256xf32>
    %74 = arith.mulf %73, %27 : vector<1x256xf32>
    %cst_30 = arith.constant 3.04452252 : f32
    %75 = vector.broadcast %cst_30 : f32 to vector<1x256xf32>
    %76 = arith.addf %75, %74 : vector<1x256xf32>
    %cst_31 = arith.constant 2.000000e+00 : f32
    %77 = vector.broadcast %cst_31 : f32 to vector<1x256xf32>
    %78 = arith.mulf %77, %32 : vector<1x256xf32>
    %79 = arith.addf %76, %78 : vector<1x256xf32>
    %80 = arith.mulf %79, %24 : vector<1x256xf32>
    %cst_32 = arith.constant 6.000000e+00 : f32
    %81 = vector.broadcast %cst_32 : f32 to vector<1x256xf32>
    %82 = arith.mulf %81, %27 : vector<1x256xf32>
    %cst_33 = arith.constant 1.9459101 : f32
    %83 = vector.broadcast %cst_33 : f32 to vector<1x256xf32>
    %84 = arith.addf %83, %82 : vector<1x256xf32>
    %cst_34 = arith.constant 1.000000e+00 : f32
    %85 = vector.broadcast %cst_34 : f32 to vector<1x256xf32>
    %86 = arith.mulf %85, %32 : vector<1x256xf32>
    %87 = arith.addf %84, %86 : vector<1x256xf32>
    %88 = arith.mulf %87, %24 : vector<1x256xf32>
    %cst_35 = arith.constant 7.000000e+00 : f32
    %89 = vector.broadcast %cst_35 : f32 to vector<1x256xf32>
    %90 = arith.mulf %89, %27 : vector<1x256xf32>
    %cst_36 = arith.constant 0.000000e+00 : f32
    %91 = vector.broadcast %cst_36 : f32 to vector<1x256xf32>
    %92 = arith.addf %91, %90 : vector<1x256xf32>
    %cst_37 = arith.constant 0.000000e+00 : f32
    %93 = vector.broadcast %cst_37 : f32 to vector<1x256xf32>
    %94 = arith.mulf %93, %32 : vector<1x256xf32>
    %95 = arith.addf %92, %94 : vector<1x256xf32>
    %96 = arith.mulf %95, %24 : vector<1x256xf32>
    %97 = tpu.concatenate %40, %48, %56, %64, %72, %80, %88, %96 in 0 : vector<1x256xf32>, vector<1x256xf32>, vector<1x256xf32>, vector<1x256xf32>, vector<1x256xf32>, vector<1x256xf32>, vector<1x256xf32>, vector<1x256xf32> -> vector<8x256xf32>
    %c0_38 = arith.constant 0 : index
    %c0_39 = arith.constant 0 : index
    %98 = vector.load %arg4[%c0_38, %c0_39] : memref<8x256xf32, #tpu.memory_space<vmem>>, vector<8x256xf32>
    tpu.vector_store %arg4[%c0_38, %c0_39], %97 {strides = array<i32>} : memref<8x256xf32, #tpu.memory_space<vmem>>, vector<8x256xf32>,
    %c0_40 = arith.constant 0 : index
    %c0_41 = arith.constant 0 : index
    %99 = vector.load %arg5[%c0_40, %c0_41] : memref<1x256xf32, #tpu.memory_space<vmem>>, vector<1x256xf32>
    tpu.vector_store %arg5[%c0_40, %c0_41], %14 {strides = array<i32>} : memref<1x256xf32, #tpu.memory_space<vmem>>, vector<1x256xf32>,
    %100 = tpu.reciprocal %24 : vector<1x256xf32> -> vector<1x256xf32>
    %c0_42 = arith.constant 0 : index
    %c0_43 = arith.constant 0 : index
    %101 = vector.load %arg6[%c0_42, %c0_43] : memref<1x256xf32, #tpu.memory_space<vmem>>, vector<1x256xf32>
    tpu.vector_store %arg6[%c0_42, %c0_43], %100 {strides = array<i32>} : memref<1x256xf32, #tpu.memory_space<vmem>>, vector<1x256xf32>,
    return
  }
  func.func @transform_0(%arg0: i32) -> (i32, i32) {
    %c0_i32 = arith.constant 0 : i32
    %c0_i32_0 = arith.constant 0 : i32
    return %arg0, %c0_i32 : i32, i32
  }
  func.func @transform_1(%arg0: i32) -> (i32, i32) {
    %c0_i32 = arith.constant 0 : i32
    %c0_i32_0 = arith.constant 0 : i32
    %c0_i32_1 = arith.constant 0 : i32
    return %c0_i32, %c0_i32_0 : i32, i32
  }
  func.func @transform_2(%arg0: i32) -> (i32, i32) {
    %c0_i32 = arith.constant 0 : i32
    %c0_i32_0 = arith.constant 0 : i32
    %c0_i32_1 = arith.constant 0 : i32
    return %c0_i32, %c0_i32_0 : i32, i32
  }
  func.func @transform_3(%arg0: i32) -> (i32, i32) {
    %c0_i32 = arith.constant 0 : i32
    %c0_i32_0 = arith.constant 0 : i32
    return %c0_i32, %arg0 : i32, i32
  }
  func.func @transform_4(%arg0: i32) -> (i32, i32) {
    %c0_i32 = arith.constant 0 : i32
    %c0_i32_0 = arith.constant 0 : i32
    return %c0_i32, %arg0 : i32, i32
  }
  func.func @transform_5(%arg0: i32) -> (i32, i32) {
    %c0_i32 = arith.constant 0 : i32
    %c0_i32_0 = arith.constant 0 : i32
    return %c0_i32, %arg0 : i32, i32
  }
}

</mosaic_0001>

<llo_original>
// kernel: tpu_custom_call.1
$region0: #{tpu_custom_call.1}
  #allocation0 [shape = 'u32[]', space=smem, size = 0x4, offset = 0x4, fixed_abs, tag = 'smem constant byte address 0x4 - core index']
  #allocation1 [shape = 'u32[144,128]{1,0:T(1,128)}', space=vmem, size = 0x12000, scoped, tag = 'internal scratch']
  %s0 = inlined_call_operand.vmem [shape: f32[512,32], index: 0, kind: input, shape index: {}]
  %s1 = inlined_call_operand.vmem [shape: f32[2,32], index: 1, kind: input, shape index: {}]
  %s2 = inlined_call_operand.vmem [shape: f32[2,1], index: 2, kind: input, shape index: {}]
  %s3 = inlined_call_operand.hbm [shape: f32[8,512], index: 3, kind: output, shape index: {0}]
  %s4 = inlined_call_operand.hbm [shape: f32[1,512], index: 4, kind: output, shape index: {1}]
  %s5 = inlined_call_operand.hbm [shape: f32[1,512], index: 5, kind: output, shape index: {2}]
  %6 = xla_tuple %s3, %s4, %s5
  %s7 = sld [smem:[#allocation0]]
  $region61: #{tpu_custom_call.1} parent=0
    _
  %s9 = ssub.s32 1, %s7
  %s10 = scalar_select 0, %s9, %s7
  $region1: #{tpu_custom_call.1} parent=0
    #allocation2 [shape = 'u8[16384]{0}', space=vmem, size = 0x4000, scoped, tag = 'output window, operand 0']
    #allocation3 [shape = 's32[2]{0}', space=sflag, size = 0x8, scoped, tag = 'scoped memory for tpu_custom_call.1']
    #allocation4 [shape = 'u8[2048]{0}', space=vmem, size = 0x800, scoped, tag = 'output window, operand 1']
    #allocation5 [shape = 's32[2]{0}', space=sflag, size = 0x8, scoped, tag = 'scoped memory for tpu_custom_call.1']
    #allocation6 [shape = 'u8[2048]{0}', space=vmem, size = 0x800, scoped, tag = 'output window, operand 2']
    %11 = vsyncpa [#allocation3], 0
    %s12 = scalar_lea.sflag [#allocation3], 1
    %13 = vsyncpa %s12, 0
    %14 = vsyncpa [#allocation5], 0
    %s15 = scalar_lea.sflag [#allocation5], 1
    %16 = vsyncpa %s15, 0
    loop: start=0, step=1, limit=4
    $region2: #{tpu_custom_call.1} parent=1 // loop_pre_header
      _
    $region3: #{tpu_custom_call.1} parent=1 // loop_header
      %s18 = sphi 0, %s22
      %p19 = scmp.ge.s32.totalorder %s18, 4
      %s28 = sphi 0, %s30
      %s31 = sphi 0, %s28
      %s32 = sphi 0, %s31
      %s48 = sphi 0, %s32
      %s52 = sphi 0, %s52
      %s54 = sphi 0, %s52
      %s55 = sphi 0, %s54
      %s69 = sphi 0, %s55
      %s73 = sphi 0, %s73
      %s75 = sphi 0, %s73
      %s76 = sphi 0, %s75
      %s90 = sphi 0, %s76
      %s96 = sphi 0, %s98
      %s99 = sphi 0, %s96
      %s100 = sphi 0, %s99
      %s116 = sphi 0, %s100
      %s122 = sphi 0, %s124
      %s125 = sphi 0, %s122
      %s126 = sphi 0, %s125
      %s142 = sphi 0, %s126
      %s148 = sphi 0, %s150
      %s151 = sphi 0, %s148
      %s152 = sphi 0, %s151
      %s168 = sphi 0, %s152
    $region4: #{tpu_custom_call.1} parent=1 // loop_header_branch
      %21 = sbr.rel (%p19) target = $region8
    $region5: #{tpu_custom_call.1} parent=1 // loop_body
      %s23 = ssub.s32 %s18, 1
      %s24 = ssub.s32 %s18, 2
      %s25 = sadd.s32 %s18, 1
      %s26 = ssub.s32 %s18, %s25
      %p27 = scmp.eq.s32.totalorder %s26, 0
      %s29 = sadd.s32 %s28, 1
      %s30 = scalar_select %p27, %s28, %s29
      %p33 = pneg %p27
      %p34 = scmp.eq.s32.totalorder %s18, 1
      %p35 = por %p33, %p34
      %p36 = scmp.ne.s32.totalorder %s28, %s31
      %p37 = scmp.eq.s32.totalorder %s18, 0
      %p38 = por %p36, %p37
      %p39 = scmp.ne.s32.totalorder %s28, %s31
      %p40 = scmp.eq.s32.totalorder %s23, 1
      %p41 = por %p39, %p40
      %p42 = scmp.ne.s32.totalorder %s31, %s32
      %p43 = scmp.eq.s32.totalorder %s23, 0
      %p44 = por %p42, %p43
      %p45 = scmp.ne.s32.totalorder %s31, %s32
      %p46 = scmp.eq.s32.totalorder %s24, 1
      %p47 = por %p45, %p46
      %p49 = scmp.ne.s32.totalorder %s32, %s48
      %p50 = scmp.eq.s32.totalorder %s24, 0
      %p51 = por %p49, %p50
      %s53 = sadd.s32 %s52, 1
      %p56 = scmp.eq.s32.totalorder %s18, 1
      %p57 = scmp.ne.s32.totalorder %s52, %s54
      %p58 = scmp.eq.s32.totalorder %s18, 0
      %p59 = por %p57, %p58
      %p60 = scmp.ne.s32.totalorder %s52, %s54
      %p61 = scmp.eq.s32.totalorder %s23, 1
      %p62 = por %p60, %p61
      %p63 = scmp.ne.s32.totalorder %s54, %s55
      %p64 = scmp.eq.s32.totalorder %s23, 0
      %p65 = por %p63, %p64
      %p66 = scmp.ne.s32.totalorder %s54, %s55
      %p67 = scmp.eq.s32.totalorder %s24, 1
      %p68 = por %p66, %p67
      %p70 = scmp.ne.s32.totalorder %s55, %s69
      %p71 = scmp.eq.s32.totalorder %s24, 0
      %p72 = por %p70, %p71
      %s74 = sadd.s32 %s73, 1
      %p77 = scmp.eq.s32.totalorder %s18, 1
      %p78 = scmp.ne.s32.totalorder %s73, %s75
      %p79 = scmp.eq.s32.totalorder %s18, 0
      %p80 = por %p78, %p79
      %p81 = scmp.ne.s32.totalorder %s73, %s75
      %p82 = scmp.eq.s32.totalorder %s23, 1
      %p83 = por %p81, %p82
      %p84 = scmp.ne.s32.totalorder %s75, %s76
      %p85 = scmp.eq.s32.totalorder %s23, 0
      %p86 = por %p84, %p85
      %p87 = scmp.ne.s32.totalorder %s75, %s76
      %p88 = scmp.eq.s32.totalorder %s24, 1
      %p89 = por %p87, %p88
      %p91 = scmp.ne.s32.totalorder %s76, %s90
      %p92 = scmp.eq.s32.totalorder %s24, 0
      %p93 = por %p91, %p92
      %s94 = ssub.s32 %s18, %s25
      %p95 = scmp.eq.s32.totalorder %s94, 0
      %s97 = sadd.s32 %s96, 1
      %s98 = scalar_select %p95, %s96, %s97
      %p101 = pneg %p95
      %p102 = scmp.eq.s32.totalorder %s18, 1
      %p103 = por %p101, %p102
      %p104 = scmp.ne.s32.totalorder %s96, %s99
      %p105 = scmp.eq.s32.totalorder %s18, 0
      %p106 = por %p104, %p105
      %p107 = scmp.ne.s32.totalorder %s96, %s99
      %p108 = scmp.eq.s32.totalorder %s23, 1
      %p109 = por %p107, %p108
      %p110 = scmp.ne.s32.totalorder %s99, %s100
      %p111 = scmp.eq.s32.totalorder %s23, 0
      %p112 = por %p110, %p111
      %p113 = scmp.ne.s32.totalorder %s99, %s100
      %p114 = scmp.eq.s32.totalorder %s24, 1
      %p115 = por %p113, %p114
      %p117 = scmp.ne.s32.totalorder %s100, %s116
      %p118 = scmp.eq.s32.totalorder %s24, 0
      %p119 = por %p117, %p118
      %s120 = ssub.s32 %s18, %s25
      %p121 = scmp.eq.s32.totalorder %s120, 0
      %s123 = sadd.s32 %s122, 1
      %s124 = scalar_select %p121, %s122, %s123
      %p127 = pneg %p121
      %p128 = scmp.eq.s32.totalorder %s18, 1
      %p129 = por %p127, %p128
      %p130 = scmp.ne.s32.totalorder %s122, %s125
      %p131 = scmp.eq.s32.totalorder %s18, 0
      %p132 = por %p130, %p131
      %p133 = scmp.ne.s32.totalorder %s122, %s125
      %p134 = scmp.eq.s32.totalorder %s23, 1
      %p135 = por %p133, %p134
      %p136 = scmp.ne.s32.totalorder %s125, %s126
      %p137 = scmp.eq.s32.totalorder %s23, 0
      %p138 = por %p136, %p137
      %p139 = scmp.ne.s32.totalorder %s125, %s126
      %p140 = scmp.eq.s32.totalorder %s24, 1
      %p141 = por %p139, %p140
      %p143 = scmp.ne.s32.totalorder %s126, %s142
      %p144 = scmp.eq.s32.totalorder %s24, 0
      %p145 = por %p143, %p144
      %s146 = ssub.s32 %s18, %s25
      %p147 = scmp.eq.s32.totalorder %s146, 0
      %s149 = sadd.s32 %s148, 1
      %s150 = scalar_select %p147, %s148, %s149
      %p153 = pneg %p147
      %p154 = scmp.eq.s32.totalorder %s18, 1
      %p155 = por %p153, %p154
      %p156 = scmp.ne.s32.totalorder %s148, %s151
      %p157 = scmp.eq.s32.totalorder %s18, 0
      %p158 = por %p156, %p157
      %p159 = scmp.ne.s32.totalorder %s148, %s151
      %p160 = scmp.eq.s32.totalorder %s23, 1
      %p161 = por %p159, %p160
      %p162 = scmp.ne.s32.totalorder %s151, %s152
      %p163 = scmp.eq.s32.totalorder %s23, 0
      %p164 = por %p162, %p163
      %p165 = scmp.ne.s32.totalorder %s151, %s152
      %p166 = scmp.eq.s32.totalorder %s24, 1
      %p167 = por %p165, %p166
      %p169 = scmp.ne.s32.totalorder %s152, %s168
      %p170 = scmp.eq.s32.totalorder %s24, 0
      %p171 = por %p169, %p170
      %p172 = scmp.le.s32.totalorder 1, %s18
      %p173 = scmp.lt.s32.totalorder %s18, 3
      %p174 = pnand %p172, %p173
      %p175 = pneg %p174
      // Predicated region
      $region9: #{tpu_custom_call.1} parent=5 // pred_check
        _
      $region10: #{tpu_custom_call.1} parent=5 // pred_check_branch
        %177 = sbr.rel (%p174) target = $region12
      $region11: #{tpu_custom_call.1} parent=5 // pred_region
        %s178 = ssub.s32 %s18, 1
        // Predicated region
        $region13: #{tpu_custom_call.1} parent=11 // pred_check
          %p179 = pneg %p65
        $region14: #{tpu_custom_call.1} parent=11 // pred_check_branch
          %181 = sbr.rel (%p179) target = $region16
        $region15: #{tpu_custom_call.1} parent=11 // pred_region
          _
        $region16: #{tpu_custom_call.1} parent=11 // pred_fallthru
          _
        // Predicated region
        $region17: #{tpu_custom_call.1} parent=11 // pred_check
          %p182 = pneg %p86
        $region18: #{tpu_custom_call.1} parent=11 // pred_check_branch
          %184 = sbr.rel (%p182) target = $region20
        $region19: #{tpu_custom_call.1} parent=11 // pred_region
          _
        $region20: #{tpu_custom_call.1} parent=11 // pred_fallthru
          _
      $region12: #{tpu_custom_call.1} parent=5 // pred_fallthru
        _
      %p185 = scmp.lt.s32.totalorder %s18, 2
      // Predicated region
      $region21: #{tpu_custom_call.1} parent=5 // pred_check
        %p186 = pneg %p185
      $region22: #{tpu_custom_call.1} parent=5 // pred_check_branch
        %188 = sbr.rel (%p186) target = $region24
      $region23: #{tpu_custom_call.1} parent=5 // pred_region
        // Predicated region
        $region25: #{tpu_custom_call.1} parent=23 // pred_check
          %p189 = pneg %p38
        $region26: #{tpu_custom_call.1} parent=23 // pred_check_branch
          %191 = sbr.rel (%p189) target = $region28
        $region27: #{tpu_custom_call.1} parent=23 // pred_region
          %s192 = smul.u32 32, %s18
          %p193 = scmp.lt.s32.totalorder %s192, 63
          %s194 = scalar_select %p193, %s192, 63
          %s195 = smul.addr %s194, 8
          %s196 = scalar_lea.vmem %s0, %s195
          %s197 = smul.u32 32, %s18
        $region28: #{tpu_custom_call.1} parent=23 // pred_fallthru
          _
      $region24: #{tpu_custom_call.1} parent=5 // pred_fallthru
        _
      %p198 = scmp.le.s32.totalorder 1, %s18
      %p199 = scmp.lt.s32.totalorder %s18, 3
      %p200 = pnand %p198, %p199
      %p201 = pneg %p200
      // Predicated region
      $region29: #{tpu_custom_call.1} parent=5 // pred_check
        _
      $region30: #{tpu_custom_call.1} parent=5 // pred_check_branch
        %203 = sbr.rel (%p200) target = $region32
      $region31: #{tpu_custom_call.1} parent=5 // pred_region
        %s204 = ssub.s32 %s18, 1
        %s205 = smul.u32 32, %s23
        %p206 = scmp.lt.s32.totalorder %s205, 63
        %s207 = scalar_select %p206, %s205, 63
        %s208 = smul.addr %s207, 8
        %s209 = scalar_lea.vmem %s0, %s208
        %p210 = pneg %p44
        %p211 = pneg %p41
        %p212 = pneg %p65
        %p213 = pneg %p62
        %p214 = pneg %p86
        %p215 = pneg %p83
        %p216 = pneg %p112
        %p217 = pneg %p109
        %s218 = sand.u32 %s99, 1
        %s219 = scalar_lea.sflag [#allocation3], %s218
        %s220 = sand.u32 %s99, 1
        %s221 = smul.addr %s220, 16
        %s222 = scalar_lea.vmem [#allocation2], %s221
        %p223 = pneg %p138
        %p224 = pneg %p135
        %s225 = sand.u32 %s23, 1
        %s226 = scalar_lea.sflag [#allocation5], %s225
        %s227 = sand.u32 %s125, 1
        %s228 = smul.addr %s227, 2
        %s229 = scalar_lea.vmem [#allocation4], %s228
        %p230 = pneg %p164
        %p231 = pneg %p161
        %s232 = sand.u32 %s23, 1
        %s233 = scalar_lea.sflag [#allocation5], %s232
        %s234 = sand.u32 %s151, 1
        %s235 = smul.addr %s234, 2
        %s236 = scalar_lea.vmem [#allocation6], %s235
        %s237 = smul.u32 32, %s23
        %p238 = scmp.lt.s32.totalorder %s237, 63
        %s239 = scalar_select %p238, %s237, 63
        %s240 = smul.addr %s239, 8
        %s241 = scalar_lea.vmem %s0, %s240
        %s242 = smul.u32 32, %s23
        %s243 = smul.u32 2, %s23
        %s244 = smul.u32 2, %s23
        %s245 = smul.u32 2, %s23
        %v246 = vld [vmem:[%s241] sm:$0xff]
        %v247 = vld [vmem:[%s241 + $0x8] sm:$0xff]
        %v248 = vld [vmem:[%s241 + $0x10] sm:$0xff]
        %v249 = vld [vmem:[%s241 + $0x18] sm:$0xff]
        %v250 = vld [vmem:[%s241 + $0x20] sm:$0xff]
        %v251 = vld [vmem:[%s241 + $0x28] sm:$0xff]
        %v252 = vld [vmem:[%s241 + $0x30] sm:$0xff]
        %v253 = vld [vmem:[%s241 + $0x38] sm:$0xff]
        %v254 = vld [vmem:[%s241 + $0x40] sm:$0xff]
        %v255 = vld [vmem:[%s241 + $0x48] sm:$0xff]
        %v256 = vld [vmem:[%s241 + $0x50] sm:$0xff]
        %v257 = vld [vmem:[%s241 + $0x58] sm:$0xff]
        %v258 = vld [vmem:[%s241 + $0x60] sm:$0xff]
        %v259 = vld [vmem:[%s241 + $0x68] sm:$0xff]
        %v260 = vld [vmem:[%s241 + $0x70] sm:$0xff]
        %v261 = vld [vmem:[%s241 + $0x78] sm:$0xff]
        %v262 = vld [vmem:[%s241 + $0x80] sm:$0xff]
        %v263 = vld [vmem:[%s241 + $0x88] sm:$0xff]
        %v264 = vld [vmem:[%s241 + $0x90] sm:$0xff]
        %v265 = vld [vmem:[%s241 + $0x98] sm:$0xff]
        %v266 = vld [vmem:[%s241 + $0xa0] sm:$0xff]
        %v267 = vld [vmem:[%s241 + $0xa8] sm:$0xff]
        %v268 = vld [vmem:[%s241 + $0xb0] sm:$0xff]
        %v269 = vld [vmem:[%s241 + $0xb8] sm:$0xff]
        %v270 = vld [vmem:[%s241 + $0xc0] sm:$0xff]
        %v271 = vld [vmem:[%s241 + $0xc8] sm:$0xff]
        %v272 = vld [vmem:[%s241 + $0xd0] sm:$0xff]
        %v273 = vld [vmem:[%s241 + $0xd8] sm:$0xff]
        %v274 = vld [vmem:[%s241 + $0xe0] sm:$0xff]
        %v275 = vld [vmem:[%s241 + $0xe8] sm:$0xff]
        %v276 = vld [vmem:[%s241 + $0xf0] sm:$0xff]
        %v277 = vld [vmem:[%s241 + $0xf8] sm:$0xff]
        %v278 = vld [vmem:[%s1] sm:$0x3]
        %v279 = vld [vmem:[%s2] sm:$0x3]
        %281 = vset.pattern.permute.xlu0 0
        %282 = vperm.xlu0 %281, %v279
        %v283 = vpop.permute.xlu0 %282
        %vm285 = vcmask 261120
        %v287 = vsel %vm285, %v278, 0
        %v290 = vsel %vm285, %v246, 0
        %v293 = vsel %vm285, %v247, 0
        %v296 = vsel %vm285, %v248, 0
        %v299 = vsel %vm285, %v249, 0
        %v302 = vsel %vm285, %v250, 0
        %v305 = vsel %vm285, %v251, 0
        %v308 = vsel %vm285, %v252, 0
        %v311 = vsel %vm285, %v253, 0
        %v314 = vsel %vm285, %v254, 0
        %v317 = vsel %vm285, %v255, 0
        %v320 = vsel %vm285, %v256, 0
        %v323 = vsel %vm285, %v257, 0
        %v326 = vsel %vm285, %v258, 0
        %v329 = vsel %vm285, %v259, 0
        %v332 = vsel %vm285, %v260, 0
        %v335 = vsel %vm285, %v261, 0
        %v338 = vsel %vm285, %v262, 0
        %v341 = vsel %vm285, %v263, 0
        %v344 = vsel %vm285, %v264, 0
        %v347 = vsel %vm285, %v265, 0
        %v350 = vsel %vm285, %v266, 0
        %v353 = vsel %vm285, %v267, 0
        %v356 = vsel %vm285, %v268, 0
        %v359 = vsel %vm285, %v269, 0
        %v362 = vsel %vm285, %v270, 0
        %v365 = vsel %vm285, %v271, 0
        %v368 = vsel %vm285, %v272, 0
        %v371 = vsel %vm285, %v273, 0
        %v374 = vsel %vm285, %v274, 0
        %v377 = vsel %vm285, %v275, 0
        %v380 = vsel %vm285, %v276, 0
        %v383 = vsel %vm285, %v277, 0
        %385 = vmatprep.subr.mxu0 0.0
        %386 = vmatpush1.xpose.msra.mxu0 %v335
        %387 = vmatprep.subr.mxu0 0.0
        %388 = vmatpush1.xpose.msra.mxu0 %v332
        %389 = vmatprep.subr.mxu0 0.0
        %390 = vmatpush1.xpose.msra.mxu0 %v329
        %391 = vmatprep.subr.mxu0 0.0
        %392 = vmatpush1.xpose.msra.mxu0 %v326
        %393 = vmatprep.subr.mxu0 0.0
        %394 = vmatpush1.xpose.msra.mxu0 %v323
        %395 = vmatprep.subr.mxu0 0.0
        %396 = vmatpush1.xpose.msra.mxu0 %v320
        %397 = vmatprep.subr.mxu0 0.0
        %398 = vmatpush1.xpose.msra.mxu0 %v317
        %399 = vmatprep.subr.mxu0 0.0
        %400 = vmatpush1.xpose.msra.mxu0 %v314
        %401 = vmatprep.subr.mxu0 0.0
        %402 = vmatpush1.xpose.msra.mxu0 %v311
        %403 = vmatprep.subr.mxu0 0.0
        %404 = vmatpush1.xpose.msra.mxu0 %v308
        %405 = vmatprep.subr.mxu0 0.0
        %406 = vmatpush1.xpose.msra.mxu0 %v305
        %407 = vmatprep.subr.mxu0 0.0
        %408 = vmatpush1.xpose.msra.mxu0 %v302
        %409 = vmatprep.subr.mxu0 0.0
        %410 = vmatpush1.xpose.msra.mxu0 %v299
        %411 = vmatprep.subr.mxu0 0.0
        %412 = vmatpush1.xpose.msra.mxu0 %v296
        %413 = vmatprep.subr.mxu0 0.0
        %414 = vmatpush1.xpose.msra.mxu0 %v293
        %415 = vmatprep.subr.mxu0 0.0
        %416 = vmatpush1.xpose.msra.mxu0 %v290
        %417 = vmatprep.subr.mxu0 0.0
        %418 = vmatpush2.xpose.msra.mxu0 %v383
        %419 = vmatprep.subr.mxu0 0.0
        %420 = vmatpush2.xpose.msra.mxu0 %v380
        %421 = vmatprep.subr.mxu0 0.0
        %422 = vmatpush2.xpose.msra.mxu0 %v377
        %423 = vmatprep.subr.mxu0 0.0
        %424 = vmatpush2.xpose.msra.mxu0 %v374
        %425 = vmatprep.subr.mxu0 0.0
        %426 = vmatpush2.xpose.msra.mxu0 %v371
        %427 = vmatprep.subr.mxu0 0.0
        %428 = vmatpush2.xpose.msra.mxu0 %v368
        %429 = vmatprep.subr.mxu0 0.0
        %430 = vmatpush2.xpose.msra.mxu0 %v365
        %431 = vmatprep.subr.mxu0 0.0
        %432 = vmatpush2.xpose.msra.mxu0 %v362
        %433 = vmatprep.subr.mxu0 0.0
        %434 = vmatpush2.xpose.msra.mxu0 %v359
        %435 = vmatprep.subr.mxu0 0.0
        %436 = vmatpush2.xpose.msra.mxu0 %v356
        %437 = vmatprep.subr.mxu0 0.0
        %438 = vmatpush2.xpose.msra.mxu0 %v353
        %439 = vmatprep.subr.mxu0 0.0
        %440 = vmatpush2.xpose.msra.mxu0 %v350
        %441 = vmatprep.subr.mxu0 0.0
        %442 = vmatpush2.xpose.msra.mxu0 %v347
        %443 = vmatprep.subr.mxu0 0.0
        %444 = vmatpush2.xpose.msra.mxu0 %v344
        %445 = vmatprep.subr.mxu0 0.0
        %446 = vmatpush2.xpose.msra.mxu0 %v341
        %447 = vmatprep.subr.mxu0 0.0
        %448 = vmatpush2.xpose.msra.mxu0 %v338
        %449 = vmatprep.mubr.f32.mxu0 0.0
        %450 = vmatmul.mubr.f32.gmra.mxu0 %v287
        %v451 = vpop.f32.mrf.mxu0
        %v452 = vadd.f32 %v283, %v451
        %v453 = vpop.f32.mrf.mxu0
        %v454 = vadd.f32 %v283, %v453
        %455 = vdwg.mxu0
        %v456 = vmul.f32 %v452, 0.5
        %v457 = vmul.f32 %v454, 0.5
        %v458 = vtanh.pop %v456
        %v459 = vtanh.pop %v457
        %v460 = vadd.f32 %v458, 1.0
        %v461 = vadd.f32 %v459, 1.0
        %v462 = vmul.f32 %v460, 0.5
        %v463 = vmul.f32 %v461, 0.5
        %v464 = vmax.f32 %v452, 0.0
        %v465 = vmax.f32 %v454, 0.0
        %v466 = vand.u32 2147483647, %v452
        %v467 = vand.u32 2147483647, %v454
        %v468 = vsub.f32 0.0, %v466
        %v469 = vsub.f32 0.0, %v467
        %v470 = vmul.f32 %v468, 1.442695
        %v471 = vpow.pop %v470
        %v472 = vmul.f32 %v469, 1.442695
        %v473 = vpow.pop %v472
        %v474 = vadd.f32 %v471, 1.0
        %v475 = vlog2.pop %v474
        %v476 = vmul.f32 %v475, 0.6931472
        %v477 = vmul.f32 -0.5, %v471
        %v478 = vadd.f32 %v477, 1.0
        %v479 = vmul.f32 %v478, %v471
        %v480 = vand.u32 2147483647, %v471
        %vm481 = vcmp.lt.f32.partialorder %v480, 0.0004427343
        %v482 = vsel %vm481, %v479, %v476
        %v483 = vadd.f32 %v473, 1.0
        %v484 = vlog2.pop %v483
        %v485 = vmul.f32 %v484, 0.6931472
        %v486 = vmul.f32 -0.5, %v473
        %v487 = vadd.f32 %v486, 1.0
        %v488 = vmul.f32 %v487, %v473
        %v489 = vand.u32 2147483647, %v473
        %vm490 = vcmp.lt.f32.partialorder %v489, 0.0004427343
        %v491 = vsel %vm490, %v488, %v485
        %v492 = vadd.f32 %v464, %v482
        %v493 = vadd.f32 %v465, %v491
        %v494 = vadd.f32 %v492, 1.0
        %v495 = vadd.f32 %v493, 1.0
        %v496 = vadd.f32 %v462, 1e-06
        %v497 = vadd.f32 %v463, 1e-06
        %v498 = vlog2.pop %v496
        %v499 = vmul.f32 %v498, 0.6931472
        %v500 = vlog2.pop %v497
        %v501 = vmul.f32 %v500, 0.6931472
        %v502 = vsub.f32 1.0, %v462
        %v503 = vsub.f32 1.0, %v463
        %v504 = vadd.f32 %v502, 1e-06
        %v505 = vadd.f32 %v503, 1e-06
        %v506 = vlog2.pop %v504
        %v507 = vmul.f32 %v506, 0.6931472
        %v508 = vlog2.pop %v505
        %v509 = vmul.f32 %v508, 0.6931472
        %v510 = vmul.f32 %v499, 0.0
        %v511 = vmul.f32 %v501, 0.0
        %v512 = vadd.f32 %v510, 0.0
        %v513 = vadd.f32 %v511, 0.0
        %v514 = vmul.f32 %v507, 7.0
        %v515 = vmul.f32 %v509, 7.0
        %v516 = vadd.f32 %v512, %v514
        %v517 = vadd.f32 %v513, %v515
        %v520 = vrot.slane %v494, 1
        %v521 = vrot.slane %v495, 1
        %v524 = vmul.f32 %v516, %v520
        %v525 = vmul.f32 %v517, %v521
        %v526 = vadd.f32 %v499, 1.9459101
        %v527 = vadd.f32 %v501, 1.9459101
        %v528 = vmul.f32 %v507, 6.0
        %v529 = vmul.f32 %v509, 6.0
        %v530 = vadd.f32 %v526, %v528
        %v531 = vadd.f32 %v527, %v529
        %v532 = vmul.f32 %v530, %v520
        %v533 = vmul.f32 %v531, %v521
        %v534 = vmul.f32 %v499, 2.0
        %v535 = vmul.f32 %v501, 2.0
        %v536 = vadd.f32 %v534, 3.0445225
        %v537 = vadd.f32 %v535, 3.0445225
        %v538 = vmul.f32 %v507, 5.0
        %v539 = vmul.f32 %v509, 5.0
        %v540 = vadd.f32 %v536, %v538
        %v541 = vadd.f32 %v537, %v539
        %v542 = vmul.f32 %v540, %v520
        %v543 = vmul.f32 %v541, %v521
        %v544 = vmul.f32 %v499, 3.0
        %v545 = vmul.f32 %v501, 3.0
        %v546 = vadd.f32 %v544, 3.5553482
        %v547 = vadd.f32 %v545, 3.5553482
        %v548 = vmul.f32 %v507, 4.0
        %v549 = vmul.f32 %v509, 4.0
        %v550 = vadd.f32 %v546, %v548
        %v551 = vadd.f32 %v547, %v549
        %v552 = vmul.f32 %v550, %v520
        %v553 = vmul.f32 %v551, %v521
        %v554 = vmul.f32 %v499, 4.0
        %v555 = vmul.f32 %v501, 4.0
        %v556 = vadd.f32 %v554, 3.5553482
        %v557 = vadd.f32 %v555, 3.5553482
        %v558 = vmul.f32 %v507, 3.0
        %v559 = vmul.f32 %v509, 3.0
        %v560 = vadd.f32 %v556, %v558
        %v561 = vadd.f32 %v557, %v559
        %v562 = vmul.f32 %v560, %v520
        %v563 = vmul.f32 %v561, %v521
        %v564 = vmul.f32 %v499, 5.0
        %v565 = vmul.f32 %v501, 5.0
        %v566 = vadd.f32 %v564, 3.0445225
        %v567 = vadd.f32 %v565, 3.0445225
        %v568 = vmul.f32 %v507, 2.0
        %v569 = vmul.f32 %v509, 2.0
        %v570 = vadd.f32 %v566, %v568
        %v571 = vadd.f32 %v567, %v569
        %v572 = vmul.f32 %v570, %v520
        %v573 = vmul.f32 %v571, %v521
        %v574 = vmul.f32 %v499, 6.0
        %v575 = vmul.f32 %v501, 6.0
        %v576 = vadd.f32 %v574, 1.9459101
        %v577 = vadd.f32 %v575, 1.9459101
        %v578 = vadd.f32 %v576, %v507
        %v579 = vadd.f32 %v577, %v509
        %v580 = vmul.f32 %v578, %v520
        %v581 = vmul.f32 %v579, %v521
        %v582 = vmul.f32 %v499, 7.0
        %v583 = vmul.f32 %v501, 7.0
        %v584 = vadd.f32 %v582, 0.0
        %v585 = vadd.f32 %v583, 0.0
        %v586 = vmul.f32 %v507, 0.0
        %v587 = vmul.f32 %v509, 0.0
        %v588 = vadd.f32 %v584, %v586
        %v589 = vadd.f32 %v585, %v587
        %v590 = vmul.f32 %v588, %v520
        %v591 = vmul.f32 %v589, %v521
        %v594 = vrot.slane %v532, 7
        %v595 = vrot.slane %v533, 7
        %v600 = vrot.slane %v542, 6
        %v601 = vrot.slane %v543, 6
        %v606 = vrot.slane %v552, 5
        %v607 = vrot.slane %v553, 5
        %v612 = vrot.slane %v562, 4
        %v613 = vrot.slane %v563, 4
        %v618 = vrot.slane %v572, 3
        %v619 = vrot.slane %v573, 3
        %v624 = vrot.slane %v580, 2
        %v625 = vrot.slane %v581, 2
        %v630 = vrot.slane %v590, 1
        %v631 = vrot.slane %v591, 1
        %vm634 = vcmask 1040384
        %v635 = vsel %vm634, %v524, %v594
        %v636 = vsel %vm634, %v525, %v595
        %vm637 = vcmask 1041408
        %v638 = vsel %vm637, %v635, %v600
        %v639 = vsel %vm637, %v636, %v601
        %vm640 = vcmask 1042432
        %v641 = vsel %vm640, %v638, %v606
        %v642 = vsel %vm640, %v639, %v607
        %vm643 = vcmask 1043456
        %v644 = vsel %vm643, %v641, %v612
        %v645 = vsel %vm643, %v642, %v613
        %vm646 = vcmask 1044480
        %v647 = vsel %vm646, %v644, %v618
        %v648 = vsel %vm646, %v645, %v619
        %vm649 = vcmask 1045504
        %v650 = vsel %vm649, %v647, %v624
        %v651 = vsel %vm649, %v648, %v625
        %vm652 = vcmask 1046528
        %v653 = vsel %vm652, %v650, %v630
        %v654 = vsel %vm652, %v651, %v631
        %655 = vst [vmem:[%s222] sm:$0xff] %v653
        %656 = vst [vmem:[%s222 + $0x8] sm:$0xff] %v654
        %v659 = vcombine.low %v462, %v463
        %v661 = vunpack.c.l.s4 1966171168
        %v662 = vunpack.c.0.s8 %v661
        %v663 = vlaneseq
        %v664 = vshrl.u32 %v663, 7
        %v665 = vsub.s32 %v662, %v664
        %v666 = vrot.slane %v659, %v665
        %v668 = vunpack.c.l.s4 1966171168
        %v669 = vunpack.c.0.s8 %v668
        %v670 = vlaneseq
        %v671 = vshrl.u32 %v670, 7
        %v672 = vsub.s32 %v669, %v671
        %v673 = vrot.slane %v666, %v672
        %v675 = vlaneseq
        %vm676 = vcmp.ge.s32.totalorder %v675, 0
        %vm677 = vcmp.lt.s32.totalorder %v675, 256
        %vm678 = vmand %vm676, %vm677
        %679 = vst.msk [vmem:[%s229] sm:$0x3] %vm678, %v673
        %v680 = vrcp.pop %v494
        %v681 = vrcp.pop %v495
        %v684 = vcombine.low %v680, %v681
        %v686 = vunpack.c.l.s4 1966171168
        %v687 = vunpack.c.0.s8 %v686
        %v688 = vlaneseq
        %v689 = vshrl.u32 %v688, 7
        %v690 = vsub.s32 %v687, %v689
        %v691 = vrot.slane %v684, %v690
        %v692 = vcombine.high %v691, %v691
        %v694 = vunpack.c.l.s4 1966171168
        %v695 = vunpack.c.0.s8 %v694
        %v696 = vlaneseq
        %v697 = vshrl.u32 %v696, 7
        %v698 = vsub.s32 %v695, %v697
        %v699 = vrot.slane %v692, %v698
        %701 = vst.msk [vmem:[%s236] sm:$0x3] %vm678, %v699
        %s702 = sand.u32 %s99, 1
        %s703 = scalar_lea.sflag [#allocation3], %s702
        %s704 = sand.u32 %s99, 1
        %s705 = smul.addr %s704, 16
        %s706 = scalar_lea.vmem [#allocation2], %s705
        %s707 = sand.u32 %s23, 1
        %s708 = scalar_lea.sflag [#allocation5], %s707
        %s709 = sand.u32 %s125, 1
        %s710 = smul.addr %s709, 2
        %s711 = scalar_lea.vmem [#allocation4], %s710
        %s712 = sand.u32 %s23, 1
        %s713 = scalar_lea.sflag [#allocation5], %s712
        %s714 = sand.u32 %s151, 1
        %s715 = smul.addr %s714, 2
        %s716 = scalar_lea.vmem [#allocation6], %s715
        // Predicated region
        $region33: #{tpu_custom_call.1} parent=31 // pred_check
          %p717 = pneg %p109
        $region34: #{tpu_custom_call.1} parent=31 // pred_check_branch
          %719 = sbr.rel (%p717) target = $region36
        $region35: #{tpu_custom_call.1} parent=31 // pred_region
          %s720 = smul.u32 2, %s23
          %s722 = ssub.s32 256, 256
          %723 = vsyncadd %s703, %s722
          %s724 = smul.addr %s720, 128
          %s725 = scalar_lea.hbm %s3, %s724
          %s727 = sshll.u32 %s706, 4
          %s728 = int_to_ptr.vmem [resolvable:$true] %s727
          %730 = dma.vmem_to_hbm [thread:$0]  %s728, 256, %s725, %s703
        $region36: #{tpu_custom_call.1} parent=31 // pred_fallthru
          _
        // Predicated region
        $region37: #{tpu_custom_call.1} parent=31 // pred_check
          %p731 = pneg %p135
        $region38: #{tpu_custom_call.1} parent=31 // pred_check_branch
          %733 = sbr.rel (%p731) target = $region40
        $region39: #{tpu_custom_call.1} parent=31 // pred_region
          %s734 = smul.u32 2, %s23
          %s736 = ssub.s32 32, 32
          %737 = vsyncadd %s708, %s736
          %s738 = smul.addr %s734, 16
          %s739 = scalar_lea.hbm %s4, %s738
          %s741 = sshll.u32 %s711, 4
          %s742 = int_to_ptr.vmem [resolvable:$true] %s741
          %744 = dma.vmem_to_hbm [thread:$0]  %s742, 32, %s739, %s708
        $region40: #{tpu_custom_call.1} parent=31 // pred_fallthru
          _
        // Predicated region
        $region41: #{tpu_custom_call.1} parent=31 // pred_check
          %p745 = pneg %p161
        $region42: #{tpu_custom_call.1} parent=31 // pred_check_branch
          %747 = sbr.rel (%p745) target = $region44
        $region43: #{tpu_custom_call.1} parent=31 // pred_region
          %s748 = smul.u32 2, %s23
          %s750 = ssub.s32 32, 32
          %751 = vsyncadd %s713, %s750
          %s752 = smul.addr %s748, 16
          %s753 = scalar_lea.hbm %s5, %s752
          %s755 = sshll.u32 %s716, 4
          %s756 = int_to_ptr.vmem [resolvable:$true] %s755
          %758 = dma.vmem_to_hbm [thread:$0]  %s756, 32, %s753, %s713
        $region44: #{tpu_custom_call.1} parent=31 // pred_fallthru
          _
      $region32: #{tpu_custom_call.1} parent=5 // pred_fallthru
        _
      %p759 = scmp.le.s32.totalorder 2, %s18
      // Predicated region
      $region45: #{tpu_custom_call.1} parent=5 // pred_check
        %p760 = pneg %p759
      $region46: #{tpu_custom_call.1} parent=5 // pred_check_branch
        %762 = sbr.rel (%p760) target = $region48
      $region47: #{tpu_custom_call.1} parent=5 // pred_region
        %s763 = ssub.s32 %s18, 2
        // Predicated region
        $region49: #{tpu_custom_call.1} parent=47 // pred_check
          %p764 = pneg %p115
        $region50: #{tpu_custom_call.1} parent=47 // pred_check_branch
          %766 = sbr.rel (%p764) target = $region52
        $region51: #{tpu_custom_call.1} parent=47 // pred_region
          %s767 = sand.u32 %s100, 1
          %s768 = scalar_lea.sflag [#allocation3], %s767
          %s769 = sand.u32 %s100, 1
          %s770 = smul.addr %s769, 16
          %s771 = scalar_lea.vmem [#allocation2], %s770
          %772 = dma.done %s768, 256
        $region52: #{tpu_custom_call.1} parent=47 // pred_fallthru
          _
        // Predicated region
        $region53: #{tpu_custom_call.1} parent=47 // pred_check
          %p773 = pneg %p141
        $region54: #{tpu_custom_call.1} parent=47 // pred_check_branch
          %775 = sbr.rel (%p773) target = $region56
        $region55: #{tpu_custom_call.1} parent=47 // pred_region
          %s776 = sand.u32 %s24, 1
          %s777 = scalar_lea.sflag [#allocation5], %s776
          %s778 = sand.u32 %s126, 1
          %s779 = smul.addr %s778, 2
          %s780 = scalar_lea.vmem [#allocation4], %s779
          %781 = dma.done %s777, 32
        $region56: #{tpu_custom_call.1} parent=47 // pred_fallthru
          _
        // Predicated region
        $region57: #{tpu_custom_call.1} parent=47 // pred_check
          %p782 = pneg %p167
        $region58: #{tpu_custom_call.1} parent=47 // pred_check_branch
          %784 = sbr.rel (%p782) target = $region60
        $region59: #{tpu_custom_call.1} parent=47 // pred_region
          %s785 = sand.u32 %s24, 1
          %s786 = scalar_lea.sflag [#allocation5], %s785
          %s787 = sand.u32 %s152, 1
          %s788 = smul.addr %s787, 2
          %s789 = scalar_lea.vmem [#allocation6], %s788
          %790 = dma.done %s786, 32
        $region60: #{tpu_custom_call.1} parent=47 // pred_fallthru
          _
      $region48: #{tpu_custom_call.1} parent=5 // pred_fallthru
        _
    $region6: #{tpu_custom_call.1} parent=1 // loop_footer
      %s22 = sadd.s32 1, %s18
    $region7: #{tpu_custom_call.1} parent=1 // loop_footer_branch
      %17 = sbr.rel target = $region3
    $region8: #{tpu_custom_call.1} parent=1 // loop_exit
      _
    %791 = vsyncpa [#allocation3], 1
    %s792 = scalar_lea.sflag [#allocation3], 1
    %793 = vsyncpa %s792, 1
    %794 = vsyncpa [#allocation5], 1
    %s795 = scalar_lea.sflag [#allocation5], 1
    %796 = vsyncpa %s795, 1

</llo_original>
